<compile_context>
chip_gen: v7x
topology: tpu7x:2x2x1
jax: 0.10.0
libtpu: 0.0.40
codegen_flags: <defaults>
</compile_context>

<pallas_src>
import functools

import numpy as np
import jax
import jax.numpy as jnp
from jax.experimental import pallas as pl
from jax.experimental.pallas import tpu as pltpu


# ---------------------------------------------------------------------------
# Helpers
# ---------------------------------------------------------------------------
def _pick_tile(n, target):
    """Largest tile <= target that divides n (falls back to full extent)."""
    if n <= target:
        return n
    t = target
    while t >= 8:
        if n % t == 0:
            return t
        t //= 2
    return n


def _nbytes(shape, dtype):
    return int(np.prod(shape)) * jnp.dtype(dtype).itemsize


def _vmem_limit(nbytes):
    """Explicit scoped-VMEM budget: 1.5x accounting, clamped under v7x physical."""
    return int(min(max(int(nbytes * 1.5), 16 * 1024 * 1024), 60 * 1024 * 1024))


def _resident_spec(shape, index_map):
    """Single-buffered BlockSpec for blocks whose index_map is constant across the
    grid (weights/params): halves their resident VMEM at zero bandwidth cost."""
    try:
        return pl.BlockSpec(shape, index_map, pipeline_mode=pl.Buffered(buffer_count=1))
    except (TypeError, AttributeError):
        # Older JAX without pipeline_mode/Buffered: fall back to default buffering.
        return pl.BlockSpec(shape, index_map)


# ---------------------------------------------------------------------------
# QKV projection: x [M, D] -> Q, K, V each [M, D]  (three dots, no [tm,3D] temp)
# ---------------------------------------------------------------------------
def _qkv_kernel(x_ref, wq_ref, wk_ref, wv_ref, bq_ref, bk_ref, bv_ref,
                oq_ref, ok_ref, ov_ref):
    x = x_ref[...]
    oq_ref[...] = (jnp.dot(x, wq_ref[...], preferred_element_type=jnp.float32)
                   + bq_ref[...]).astype(oq_ref.dtype)
    ok_ref[...] = (jnp.dot(x, wk_ref[...], preferred_element_type=jnp.float32)
                   + bk_ref[...]).astype(ok_ref.dtype)
    ov_ref[...] = (jnp.dot(x, wv_ref[...], preferred_element_type=jnp.float32)
                   + bv_ref[...]).astype(ov_ref.dtype)


def qkv_projection(x, wq, wk, wv, bq, bk, bv):
    M, D = x.shape
    tm = _pick_tile(M, 512)
    out_sds = jax.ShapeDtypeStruct((M, D), jnp.bfloat16)
    row = pl.BlockSpec((tm, D), lambda i: (i, 0))
    budget = (3 * _nbytes((D, D), jnp.bfloat16) + 3 * _nbytes((1, D), jnp.float32)
              + 2 * 4 * _nbytes((tm, D), jnp.bfloat16))
    return pl.pallas_call(
        _qkv_kernel,
        out_shape=(out_sds, out_sds, out_sds),
        grid=(M // tm,),
        in_specs=[
            row,
            _resident_spec((D, D), lambda i: (0, 0)),
            _resident_spec((D, D), lambda i: (0, 0)),
            _resident_spec((D, D), lambda i: (0, 0)),
            _resident_spec((1, D), lambda i: (0, 0)),
            _resident_spec((1, D), lambda i: (0, 0)),
            _resident_spec((1, D), lambda i: (0, 0)),
        ],
        out_specs=(row, row, row),
        compiler_params=pltpu.CompilerParams(
            dimension_semantics=("parallel",),
            vmem_limit_bytes=_vmem_limit(budget)),
    )(x, wq, wk, wv, bq, bk, bv)


# ---------------------------------------------------------------------------
# Flash-style causal MHSA (KV-tiled online softmax, in-kernel ALiBi) fused with
# the output projection Wo + residual add + LayerNorm epilogue.
# Grid: (B * q_tiles  [parallel],  kv_tiles  [arbitrary]).
# ---------------------------------------------------------------------------
def _attn_block_kernel(q_ref, k_ref, v_ref, res_ref, wo_ref, bo_ref, g_ref, bln_ref,
                       o_ref, acc_ref, m_ref, l_ref,
                       *, n_heads, d_k, head_scales, tq, tkv, nq):
    i = pl.program_id(0)
    kv = pl.program_id(1)
    nkv = pl.num_programs(1)
    qi = i % nq                      # q-tile index within the sequence

    @pl.when(kv == 0)
    def _init():
        acc_ref[...] = jnp.zeros_like(acc_ref)
        m_ref[...] = jnp.full_like(m_ref, -jnp.inf)
        l_ref[...] = jnp.zeros_like(l_ref)

    # Skip KV tiles lying entirely above the causal diagonal (their DMA is also
    # elided by the clamped kv index_map in the wrapper).
    @pl.when(kv * tkv <= qi * tq + tq - 1)
    def _compute():
        q = q_ref[...]               # [tq, D] bf16 (1/sqrt(d_k) folded into Wq)
        kk = k_ref[...]              # [tkv, D] bf16
        vv = v_ref[...]

        # ALiBi bias + causal mask from iota (exact port of _make_alibi:
        # V[i, j] = j - i, tril, * head_scale); masked entries -> large negative.
        row = jax.lax.broadcasted_iota(jnp.int32, (tq, tkv), 0) + qi * tq
        col = jax.lax.broadcasted_iota(jnp.int32, (tq, tkv), 1) + kv * tkv
        causal = col <= row
        delta = (col - row).astype(jnp.float32)

        bias_cache = {}              # pos_emb_scaling often shared across heads
        for h in range(n_heads):
            hs = head_scales[h]
            if hs not in bias_cache:
                bias_cache[hs] = jnp.where(causal, delta * hs, -1e30)
            bias = bias_cache[hs]

            sl = slice(h * d_k, (h + 1) * d_k)
            s = jax.lax.dot_general(q[:, sl], kk[:, sl], (((1,), (1,)), ((), ())),
                                    preferred_element_type=jnp.float32) + bias
            m_prev = m_ref[h]                                   # [tq, 1]
            m_new = jnp.maximum(m_prev, jnp.max(s, axis=-1, keepdims=True))
            alpha = jnp.exp(m_prev - m_new)
            p = jnp.exp(s - m_new)
            l_ref[h] = alpha * l_ref[h] + jnp.sum(p, axis=-1, keepdims=True)
            # Per-head result written straight into its [tq, d_k] accumulator slice.
            acc_ref[:, sl] = alpha * acc_ref[:, sl] + jnp.dot(
                p.astype(jnp.bfloat16), vv[:, sl],
                preferred_element_type=jnp.float32)
            m_ref[h] = m_new

    @pl.when(kv == nkv - 1)
    def _finalize():
        # Normalize each head, then fused: Wo projection + bias + residual + LayerNorm.
        for h in range(n_heads):
            sl = slice(h * d_k, (h + 1) * d_k)
            inv = pl.reciprocal(l_ref[h], approx=True)
            acc_ref[:, sl] = acc_ref[:, sl] * inv
        att = acc_ref[...].astype(jnp.bfloat16)
        y = jnp.dot(att, wo_ref[...], preferred_element_type=jnp.float32)
        y = y + bo_ref[...] + res_ref[...].astype(jnp.float32)
        mu = jnp.mean(y, axis=-1, keepdims=True)
        var = jnp.mean(jnp.square(y - mu), axis=-1, keepdims=True)
        yn = (y - mu) * jax.lax.rsqrt(var + 1e-5)
        o_ref[...] = (yn * g_ref[...] + bln_ref[...]).astype(o_ref.dtype)


def attention_block(q, k, v, res, wo, bo, ln_g, ln_b, n_heads, head_scales):
    """q, k, v: [B, L, D] bf16; res: [B*L, D] bf16 -> post-LN hidden [B*L, D] bf16."""
    B, L, D = q.shape
    M = B * L
    d_k = D // n_heads
    tq = _pick_tile(L, 256)
    tkv = _pick_tile(L, 512)
    nq = L // tq
    nkv = L // tkv

    kern = functools.partial(_attn_block_kernel, n_heads=n_heads, d_k=d_k,
                             head_scales=tuple(head_scales), tq=tq, tkv=tkv, nq=nq)

    def q_map(i, kv):
        return (i // nq, i % nq, 0)

    def kv_map(i, kv):
        # Clamp: once past this q-tile's diagonal, keep pointing at the same
        # (already fetched) KV block so Pallas skips the DMA entirely.
        last = ((i % nq) * tq + tq - 1) // tkv
        return (i // nq, jnp.minimum(kv, last), 0)

    def row_map(i, kv):
        return (i, 0)

    budget = (_nbytes((D, D), jnp.bfloat16) + 3 * _nbytes((1, D), jnp.float32)
              + 2 * (3 * _nbytes((tq, D), jnp.bfloat16)          # q, res, out (2x buf)
                     + 2 * _nbytes((tkv, D), jnp.bfloat16))      # k, v (2x buf)
              + _nbytes((tq, D), jnp.float32)                    # acc scratch
              + 2 * n_heads * tq * 128 * 4)                      # m/l (lane padded)

    return pl.pallas_call(
        kern,
        out_shape=jax.ShapeDtypeStruct((M, D), jnp.bfloat16),
        grid=(B * nq, nkv),   # flattened (batch, q-tile) => many parallel iterations
        in_specs=[
            pl.BlockSpec((None, tq, D), q_map),
            pl.BlockSpec((None, tkv, D), kv_map),
            pl.BlockSpec((None, tkv, D), kv_map),
            pl.BlockSpec((tq, D), row_map),
            _resident_spec((D, D), lambda i, kv: (0, 0)),
            _resident_spec((1, D), lambda i, kv: (0, 0)),
            _resident_spec((1, D), lambda i, kv: (0, 0)),
            _resident_spec((1, D), lambda i, kv: (0, 0)),
        ],
        out_specs=pl.BlockSpec((tq, D), row_map),
        scratch_shapes=[
            pltpu.VMEM((tq, D), jnp.float32),            # output accumulator
            pltpu.VMEM((n_heads, tq, 1), jnp.float32),   # running max per head
            pltpu.VMEM((n_heads, tq, 1), jnp.float32),   # running denom per head
        ],
        compiler_params=pltpu.CompilerParams(
            dimension_semantics=("parallel", "arbitrary"),
            vmem_limit_bytes=_vmem_limit(budget)),
    )(q, k, v, res, wo, bo, ln_g, ln_b)


# ---------------------------------------------------------------------------
# Fused FFN, tiled over d_ff:  acc += GELU(h @ W1[:,k] + b1[k]) @ W2[k,:]
# finalize: +b2 + residual -> LayerNorm
# ---------------------------------------------------------------------------
def _ffn_ln_kernel(h_ref, w1_ref, b1_ref, w2_ref, b2_ref, g_ref, bln_ref,
                   o_ref, acc_ref):
    k = pl.program_id(1)

    @pl.when(k == 0)
    def _init():
        acc_ref[...] = jnp.zeros_like(acc_ref)

    h = h_ref[...]
    t = jnp.dot(h, w1_ref[...], preferred_element_type=jnp.float32) + b1_ref[...]
    t = jax.nn.gelu(t)   # tanh approximation (see TODO at top of file)
    acc_ref[...] += jnp.dot(t.astype(jnp.bfloat16), w2_ref[...],
                            preferred_element_type=jnp.float32)

    @pl.when(k == pl.num_programs(1) - 1)
    def _finalize():
        y = acc_ref[...] + b2_ref[...] + h.astype(jnp.float32)
        mu = jnp.mean(y, axis=-1, keepdims=True)
        var = jnp.mean(jnp.square(y - mu), axis=-1, keepdims=True)
        yn = (y - mu) * jax.lax.rsqrt(var + 1e-5)
        o_ref[...] = (yn * g_ref[...] + bln_ref[...]).astype(o_ref.dtype)


def ffn_layernorm(h, w1, b1, w2, b2, ln_g, ln_b):
    M, D = h.shape
    d_ff = w1.shape[1]
    tm = _pick_tile(M, 512)
    tf = _pick_tile(d_ff, 1024)
    budget = (2 * (2 * _nbytes((tm, D), jnp.bfloat16)            # h, out (2x buf)
                   + _nbytes((D, tf), jnp.bfloat16)
                   + _nbytes((tf, D), jnp.bfloat16)
                   + _nbytes((1, tf), jnp.float32))
              + 3 * _nbytes((1, D), jnp.float32)
              + _nbytes((tm, D), jnp.float32)                    # acc scratch
              + _nbytes((tm, tf), jnp.float32))                  # GELU intermediate
    return pl.pallas_call(
        _ffn_ln_kernel,
        out_shape=jax.ShapeDtypeStruct((M, D), jnp.bfloat16),
        grid=(M // tm, d_ff // tf),
        in_specs=[
            pl.BlockSpec((tm, D), lambda i, k: (i, 0)),
            pl.BlockSpec((D, tf), lambda i, k: (0, k)),
            pl.BlockSpec((1, tf), lambda i, k: (0, k)),
            pl.BlockSpec((tf, D), lambda i, k: (k, 0)),
            _resident_spec((1, D), lambda i, k: (0, 0)),
            _resident_spec((1, D), lambda i, k: (0, 0)),
            _resident_spec((1, D), lambda i, k: (0, 0)),
        ],
        out_specs=pl.BlockSpec((tm, D), lambda i, k: (i, 0)),
        scratch_shapes=[pltpu.VMEM((tm, D), jnp.float32)],
        compiler_params=pltpu.CompilerParams(
            dimension_semantics=("parallel", "arbitrary"),
            vmem_limit_bytes=_vmem_limit(budget)),
    )(h, w1, b1, w2, b2, ln_g, ln_b)


# ---------------------------------------------------------------------------
# Output logits projection (bias=False).  Vocab tiles on the OUTER grid axis so
# each [D, tn] weight tile is DMA'd once while activation row tiles stream.
# ---------------------------------------------------------------------------
def _logits_kernel(x_ref, w_ref, o_ref):
    o_ref[...] = jnp.dot(x_ref[...], w_ref[...], preferred_element_type=jnp.float32)


def logits_projection(x, w):
    M, D = x.shape
    V = w.shape[1]
    tm = _pick_tile(M, 512)
    tn = _pick_tile(V, 1024)
    budget = 2 * (_nbytes((tm, D), jnp.bfloat16) + _nbytes((D, tn), jnp.bfloat16)
                  + _nbytes((tm, tn), jnp.float32))
    return pl.pallas_call(
        _logits_kernel,
        out_shape=jax.ShapeDtypeStruct((M, V), jnp.float32),
        grid=(V // tn, M // tm),          # M is the fastest-varying axis
        in_specs=[
            pl.BlockSpec((tm, D), lambda j, i: (i, 0)),
            pl.BlockSpec((D, tn), lambda j, i: (0, j)),
        ],
        out_specs=pl.BlockSpec((tm, tn), lambda j, i: (i, j)),
        compiler_params=pltpu.CompilerParams(
            dimension_semantics=("parallel", "parallel"),
            vmem_limit_bytes=_vmem_limit(budget)),
    )(x, w)


# ---------------------------------------------------------------------------
# Parameters (deterministic synthetic init — no checkpoint load)
# ---------------------------------------------------------------------------
def init_params(key, vocab, d_model, n_heads, n_layers, d_ff):
    d_k = d_model // n_heads
    q_scale = 1.0 / float(np.sqrt(d_k))

    def nrm(k, shape, std=0.02, dtype=jnp.bfloat16, scale=1.0):
        w = std * jax.random.normal(k, shape, dtype=jnp.float32)
        return (w * scale).astype(dtype)

    keys = jax.random.split(key, 2 + n_layers)
    params = {
        "emb": 0.02 * jax.random.normal(keys[0], (vocab, d_model), dtype=jnp.float32),
        "Wout": nrm(keys[1], (d_model, vocab)),     # out_layer has bias=False
        "layers": [],
    }
    for li in range(n_layers):
        lk = jax.random.split(keys[2 + li], 6)
        params["layers"].append({
            # 1/sqrt(d_k) folded into the Q projection (its bias is zero anyway).
            "Wq": nrm(lk[0], (d_model, d_model), scale=q_scale),
            "Wk": nrm(lk[1], (d_model, d_model)),
            "Wv": nrm(lk[2], (d_model, d_model)),
            "bq": jnp.zeros((1, d_model), jnp.float32),
            "bk": jnp.zeros((1, d_model), jnp.float32),
            "bv": jnp.zeros((1, d_model), jnp.float32),
            "Wo": nrm(lk[3], (d_model, d_model)),
            "bo": jnp.zeros((1, d_model), jnp.float32),
            "ln1_g": jnp.ones((1, d_model), jnp.float32),
            "ln1_b": jnp.zeros((1, d_model), jnp.float32),
            "W1": nrm(lk[4], (d_model, d_ff)),
            "b1": jnp.zeros((1, d_ff), jnp.float32),
            "W2": nrm(lk[5], (d_ff, d_model)),
            "b2": jnp.zeros((1, d_model), jnp.float32),
            "ln2_g": jnp.ones((1, d_model), jnp.float32),
            "ln2_b": jnp.zeros((1, d_model), jnp.float32),
        })
    return params


# ---------------------------------------------------------------------------
# Forward pass
# ---------------------------------------------------------------------------
def longnet_decoder_forward(params, tokens, pos_emb_scaling, n_heads):
    B, L = tokens.shape
    D = params["emb"].shape[1]
    V = params["Wout"].shape[1]
    # TODO(synk): verify the reference's per-head ALiBi slope assignment when
    #             len(pos_emb_scaling) != n_heads; modulo cycling assumed here.
    head_scales = tuple(float(pos_emb_scaling[h % len(pos_emb_scaling)])
                        for h in range(n_heads))

    # Embedding lookup (gather) kept as plain-JAX glue; activations carried in bf16.
    x2 = jnp.take(params["emb"], tokens, axis=0).astype(jnp.bfloat16).reshape(B * L, D)

    for lp in params["layers"]:
        q, k, v = qkv_projection(x2, lp["Wq"], lp["Wk"], lp["Wv"],
                                 lp["bq"], lp["bk"], lp["bv"])        # each [M, D] bf16
        x2 = attention_block(q.reshape(B, L, D), k.reshape(B, L, D),
                             v.reshape(B, L, D), x2,
                             lp["Wo"], lp["bo"], lp["ln1_g"], lp["ln1_b"],
                             n_heads, head_scales)                    # [M, D] bf16
        x2 = ffn_layernorm(x2, lp["W1"], lp["b1"], lp["W2"], lp["b2"],
                           lp["ln2_g"], lp["ln2_b"])                  # [M, D] bf16

    logits = logits_projection(x2, params["Wout"])                    # [M, V] f32
    return logits.reshape(B, L, V)


# ---------------------------------------------------------------------------
if __name__ == "__main__":
    # Small shapes consistent with the module's forward:
    # segment_length == seq length, dilation=1 -> full causal attention.
    B, L = 2, 32           # batch, sequence / segment_length
    D, H = 64, 4           # emb_dim, n_heads  (d_k = D // H = 16)
    N_LAYERS = 2
    VOCAB = 64             # emb_dic_len
    D_FF = 4 * D
    POS_EMB_SCALING = [0.1]

    key = jax.random.PRNGKey(0)
    k_param, k_tok = jax.random.split(key)

    params = init_params(k_param, VOCAB, D, H, N_LAYERS, D_FF)
    tokens = jax.random.randint(k_tok, (B, L), 0, VOCAB, dtype=jnp.int32)

    logits = longnet_decoder_forward(params, tokens, POS_EMB_SCALING, H)
    logits = jax.block_until_ready(logits)

    assert logits.shape == (B, L, VOCAB)
    assert logits.dtype == jnp.float32
    assert bool(jnp.all(jnp.isfinite(logits)))
    print("KERNEL_OK")
</pallas_src>

<mosaic_0001>
module attributes {stable_mosaic.version = 11 : i64} {
  func.func @_qkv_kernel(%arg0: i32, %arg1: memref<64x64xbf16, #tpu.memory_space<vmem>>, %arg2: memref<64x64xbf16, #tpu.memory_space<vmem>>, %arg3: memref<64x64xbf16, #tpu.memory_space<vmem>>, %arg4: memref<64x64xbf16, #tpu.memory_space<vmem>>, %arg5: memref<1x64xf32, #tpu.memory_space<vmem>>, %arg6: memref<1x64xf32, #tpu.memory_space<vmem>>, %arg7: memref<1x64xf32, #tpu.memory_space<vmem>>, %arg8: memref<64x64xbf16, #tpu.memory_space<vmem>>, %arg9: memref<64x64xbf16, #tpu.memory_space<vmem>>, %arg10: memref<64x64xbf16, #tpu.memory_space<vmem>>) attributes {dimension_semantics = [#tpu.dimension_semantics<parallel>], iteration_bounds = array<i64: 1>, scalar_prefetch = 0 : i64, scratch_operands = 0 : i64, tpu.core_type = #tpu.core_type<tc>, window_params = [{transform_indices = @transform_0, window_bounds = array<i64: 64, 64>}, {pipeline_mode = #tpu.pipeline_mode<synchronous>, transform_indices = @transform_1, window_bounds = array<i64: 64, 64>}, {pipeline_mode = #tpu.pipeline_mode<synchronous>, transform_indices = @transform_2, window_bounds = array<i64: 64, 64>}, {pipeline_mode = #tpu.pipeline_mode<synchronous>, transform_indices = @transform_3, window_bounds = array<i64: 64, 64>}, {pipeline_mode = #tpu.pipeline_mode<synchronous>, transform_indices = @transform_4, window_bounds = array<i64: 1, 64>}, {pipeline_mode = #tpu.pipeline_mode<synchronous>, transform_indices = @transform_5, window_bounds = array<i64: 1, 64>}, {pipeline_mode = #tpu.pipeline_mode<synchronous>, transform_indices = @transform_6, window_bounds = array<i64: 1, 64>}, {transform_indices = @transform_7, window_bounds = array<i64: 64, 64>}, {transform_indices = @transform_8, window_bounds = array<i64: 64, 64>}, {transform_indices = @transform_9, window_bounds = array<i64: 64, 64>}]} {
    %c0 = arith.constant 0 : index
    %c0_0 = arith.constant 0 : index
    %0 = vector.load %arg1[%c0, %c0_0] : memref<64x64xbf16, #tpu.memory_space<vmem>>, vector<64x64xbf16>
    %c0_1 = arith.constant 0 : index
    %c0_2 = arith.constant 0 : index
    %1 = vector.load %arg2[%c0_1, %c0_2] : memref<64x64xbf16, #tpu.memory_space<vmem>>, vector<64x64xbf16>
    %cst = arith.constant dense<0.000000e+00> : vector<64x64xf32>
    %2 = tpu.matmul %0, %1, %cst {dimension_numbers = #tpu.dot_dimension_numbers<[1], [0], [0], [1], [0, 0, 1, 1], [], []>} : vector<64x64xbf16>, vector<64x64xbf16>, vector<64x64xf32> -> vector<64x64xf32>
    %c0_3 = arith.constant 0 : index
    %c0_4 = arith.constant 0 : index
    %3 = vector.load %arg5[%c0_3, %c0_4] : memref<1x64xf32, #tpu.memory_space<vmem>>, vector<1x64xf32>
    %4 = vector.broadcast %3 : vector<1x64xf32> to vector<64x64xf32>
    %5 = arith.addf %2, %4 : vector<64x64xf32>
    %6 = arith.truncf %5 : vector<64x64xf32> to vector<64x64xbf16>
    %c0_5 = arith.constant 0 : index
    %c0_6 = arith.constant 0 : index
    %7 = vector.load %arg8[%c0_5, %c0_6] : memref<64x64xbf16, #tpu.memory_space<vmem>>, vector<64x64xbf16>
    tpu.vector_store %arg8[%c0_5, %c0_6], %6 {strides = array<i32>} : memref<64x64xbf16, #tpu.memory_space<vmem>>, vector<64x64xbf16>,
    %c0_7 = arith.constant 0 : index
    %c0_8 = arith.constant 0 : index
    %8 = vector.load %arg3[%c0_7, %c0_8] : memref<64x64xbf16, #tpu.memory_space<vmem>>, vector<64x64xbf16>
    %cst_9 = arith.constant dense<0.000000e+00> : vector<64x64xf32>
    %9 = tpu.matmul %0, %8, %cst_9 {dimension_numbers = #tpu.dot_dimension_numbers<[1], [0], [0], [1], [0, 0, 1, 1], [], []>} : vector<64x64xbf16>, vector<64x64xbf16>, vector<64x64xf32> -> vector<64x64xf32>
    %c0_10 = arith.constant 0 : index
    %c0_11 = arith.constant 0 : index
    %10 = vector.load %arg6[%c0_10, %c0_11] : memref<1x64xf32, #tpu.memory_space<vmem>>, vector<1x64xf32>
    %11 = vector.broadcast %10 : vector<1x64xf32> to vector<64x64xf32>
    %12 = arith.addf %9, %11 : vector<64x64xf32>
    %13 = arith.truncf %12 : vector<64x64xf32> to vector<64x64xbf16>
    %c0_12 = arith.constant 0 : index
    %c0_13 = arith.constant 0 : index
    %14 = vector.load %arg9[%c0_12, %c0_13] : memref<64x64xbf16, #tpu.memory_space<vmem>>, vector<64x64xbf16>
    tpu.vector_store %arg9[%c0_12, %c0_13], %13 {strides = array<i32>} : memref<64x64xbf16, #tpu.memory_space<vmem>>, vector<64x64xbf16>,
    %c0_14 = arith.constant 0 : index
    %c0_15 = arith.constant 0 : index
    %15 = vector.load %arg4[%c0_14, %c0_15] : memref<64x64xbf16, #tpu.memory_space<vmem>>, vector<64x64xbf16>
    %cst_16 = arith.constant dense<0.000000e+00> : vector<64x64xf32>
    %16 = tpu.matmul %0, %15, %cst_16 {dimension_numbers = #tpu.dot_dimension_numbers<[1], [0], [0], [1], [0, 0, 1, 1], [], []>} : vector<64x64xbf16>, vector<64x64xbf16>, vector<64x64xf32> -> vector<64x64xf32>
    %c0_17 = arith.constant 0 : index
    %c0_18 = arith.constant 0 : index
    %17 = vector.load %arg7[%c0_17, %c0_18] : memref<1x64xf32, #tpu.memory_space<vmem>>, vector<1x64xf32>
    %18 = vector.broadcast %17 : vector<1x64xf32> to vector<64x64xf32>
    %19 = arith.addf %16, %18 : vector<64x64xf32>
    %20 = arith.truncf %19 : vector<64x64xf32> to vector<64x64xbf16>
    %c0_19 = arith.constant 0 : index
    %c0_20 = arith.constant 0 : index
    %21 = vector.load %arg10[%c0_19, %c0_20] : memref<64x64xbf16, #tpu.memory_space<vmem>>, vector<64x64xbf16>
    tpu.vector_store %arg10[%c0_19, %c0_20], %20 {strides = array<i32>} : memref<64x64xbf16, #tpu.memory_space<vmem>>, vector<64x64xbf16>,
    return
  }
  func.func @transform_0(%arg0: i32) -> (i32, i32) {
    %c0_i32 = arith.constant 0 : i32
    %c0_i32_0 = arith.constant 0 : i32
    return %arg0, %c0_i32 : i32, i32
  }
  func.func @transform_1(%arg0: i32) -> (i32, i32) {
    %c0_i32 = arith.constant 0 : i32
    %c0_i32_0 = arith.constant 0 : i32
    %c0_i32_1 = arith.constant 0 : i32
    return %c0_i32, %c0_i32_0 : i32, i32
  }
  func.func @transform_2(%arg0: i32) -> (i32, i32) {
    %c0_i32 = arith.constant 0 : i32
    %c0_i32_0 = arith.constant 0 : i32
    %c0_i32_1 = arith.constant 0 : i32
    return %c0_i32, %c0_i32_0 : i32, i32
  }
  func.func @transform_3(%arg0: i32) -> (i32, i32) {
    %c0_i32 = arith.constant 0 : i32
    %c0_i32_0 = arith.constant 0 : i32
    %c0_i32_1 = arith.constant 0 : i32
    return %c0_i32, %c0_i32_0 : i32, i32
  }
  func.func @transform_4(%arg0: i32) -> (i32, i32) {
    %c0_i32 = arith.constant 0 : i32
    %c0_i32_0 = arith.constant 0 : i32
    %c0_i32_1 = arith.constant 0 : i32
    return %c0_i32, %c0_i32_0 : i32, i32
  }
  func.func @transform_5(%arg0: i32) -> (i32, i32) {
    %c0_i32 = arith.constant 0 : i32
    %c0_i32_0 = arith.constant 0 : i32
    %c0_i32_1 = arith.constant 0 : i32
    return %c0_i32, %c0_i32_0 : i32, i32
  }
  func.func @transform_6(%arg0: i32) -> (i32, i32) {
    %c0_i32 = arith.constant 0 : i32
    %c0_i32_0 = arith.constant 0 : i32
    %c0_i32_1 = arith.constant 0 : i32
    return %c0_i32, %c0_i32_0 : i32, i32
  }
  func.func @transform_7(%arg0: i32) -> (i32, i32) {
    %c0_i32 = arith.constant 0 : i32
    %c0_i32_0 = arith.constant 0 : i32
    return %arg0, %c0_i32 : i32, i32
  }
  func.func @transform_8(%arg0: i32) -> (i32, i32) {
    %c0_i32 = arith.constant 0 : i32
    %c0_i32_0 = arith.constant 0 : i32
    return %arg0, %c0_i32 : i32, i32
  }
  func.func @transform_9(%arg0: i32) -> (i32, i32) {
    %c0_i32 = arith.constant 0 : i32
    %c0_i32_0 = arith.constant 0 : i32
    return %arg0, %c0_i32 : i32, i32
  }
}

</mosaic_0001>

<llo_original>
// kernel: tpu_custom_call.1
$region0: #{tpu_custom_call.1}
  #allocation0 [shape = 'u32[]', space=smem, size = 0x4, offset = 0x4, fixed_abs, tag = 'smem constant byte address 0x4 - core index']
  #allocation1 [shape = 'u32[144,128]{1,0:T(1,128)}', space=vmem, size = 0x12000, scoped, tag = 'internal scratch']
  %s0 = inlined_call_operand.hbm [shape: bf16[64,64], index: 0, kind: input, shape index: {}]
  %s1 = inlined_call_operand.hbm [shape: bf16[64,64], index: 1, kind: input, shape index: {}]
  %s2 = inlined_call_operand.hbm [shape: bf16[64,64], index: 2, kind: input, shape index: {}]
  %s3 = inlined_call_operand.hbm [shape: bf16[64,64], index: 3, kind: input, shape index: {}]
  %s4 = inlined_call_operand.vmem [shape: f32[1,64], index: 4, kind: input, shape index: {}]
  %s5 = inlined_call_operand.vmem [shape: f32[1,64], index: 5, kind: input, shape index: {}]
  %s6 = inlined_call_operand.vmem [shape: f32[1,64], index: 6, kind: input, shape index: {}]
  %s7 = inlined_call_operand.hbm [shape: bf16[64,64], index: 7, kind: output, shape index: {0}]
  %s8 = inlined_call_operand.hbm [shape: bf16[64,64], index: 8, kind: output, shape index: {1}]
  %s9 = inlined_call_operand.hbm [shape: bf16[64,64], index: 9, kind: output, shape index: {2}]
  %10 = xla_tuple %s7, %s8, %s9
  %s11 = sld [smem:[#allocation0]]
  $region70: #{tpu_custom_call.1} parent=0
    _
  %s13 = ssub.s32 1, %s11
  %s14 = scalar_select 0, %s13, %s11
  $region1: #{tpu_custom_call.1} parent=0
    #allocation2 [shape = 'u8[16384]{0}', space=vmem, size = 0x4000, scoped, tag = 'input window, operand 0, single buffered']
    #allocation3 [shape = 's32[1]{0}', space=sflag, size = 0x4, scoped, tag = 'scoped memory for tpu_custom_call.1']
    #allocation4 [shape = 's32[1]{0}', space=sflag, size = 0x4, scoped, tag = 'scoped memory for tpu_custom_call.1']
    #allocation5 [shape = 'u8[16384]{0}', space=vmem, size = 0x4000, scoped, tag = 'input window, operand 1, single buffered']
    #allocation6 [shape = 's32[1]{0}', space=sflag, size = 0x4, scoped, tag = 'scoped memory for tpu_custom_call.1']
    #allocation7 [shape = 'u8[16384]{0}', space=vmem, size = 0x4000, scoped, tag = 'input window, operand 2, single buffered']
    #allocation8 [shape = 'u8[16384]{0}', space=vmem, size = 0x4000, scoped, tag = 'input window, operand 3, single buffered']
    #allocation9 [shape = 's32[1]{0}', space=sflag, size = 0x4, scoped, tag = 'scoped memory for tpu_custom_call.1']
    #allocation10 [shape = 'u8[16384]{0}', space=vmem, size = 0x4000, scoped, tag = 'output window, operand 0, single buffered']
    #allocation11 [shape = 'u8[16384]{0}', space=vmem, size = 0x4000, scoped, tag = 'output window, operand 1, single buffered']
    #allocation12 [shape = 's32[1]{0}', space=sflag, size = 0x4, scoped, tag = 'scoped memory for tpu_custom_call.1']
    #allocation13 [shape = 'u8[16384]{0}', space=vmem, size = 0x4000, scoped, tag = 'output window, operand 2, single buffered']
    %15 = vsyncpa [#allocation3], 0
    %16 = vsyncpa [#allocation6], 0
    %17 = vsyncpa [#allocation9], 0
    %18 = vsyncpa [#allocation4], 0
    %19 = vsyncpa [#allocation12], 0
    // Predicated region
    $region2: #{tpu_custom_call.1} parent=1 // pred_check
      _
    $region3: #{tpu_custom_call.1} parent=1 // pred_check_branch
      %21 = sbr.rel (0) target = $region5
    $region4: #{tpu_custom_call.1} parent=1 // pred_region
      %s23 = ssub.s32 512, 512
      %24 = vsyncadd [#allocation3], %s23
      %s25 = sshll.u32 [#allocation2], 4
      %s26 = int_to_ptr.vmem [resolvable:$true] %s25
      %31 = dma.hbm_to_vmem [thread:$0]  %s0, 512, %s26, [#allocation3], 64, 64, 4
    $region5: #{tpu_custom_call.1} parent=1 // pred_fallthru
      _
    // Predicated region
    $region6: #{tpu_custom_call.1} parent=1 // pred_check
      _
    $region7: #{tpu_custom_call.1} parent=1 // pred_check_branch
      %33 = sbr.rel (0) target = $region9
    $region8: #{tpu_custom_call.1} parent=1 // pred_region
      %s35 = ssub.s32 512, 512
      %36 = vsyncadd [#allocation6], %s35
      %s37 = sshll.u32 [#allocation5], 4
      %s38 = int_to_ptr.vmem [resolvable:$true] %s37
      %43 = dma.hbm_to_vmem [thread:$0]  %s1, 512, %s38, [#allocation6], 64, 64, 4
    $region9: #{tpu_custom_call.1} parent=1 // pred_fallthru
      _
    // Predicated region
    $region10: #{tpu_custom_call.1} parent=1 // pred_check
      _
    $region11: #{tpu_custom_call.1} parent=1 // pred_check_branch
      %45 = sbr.rel (0) target = $region13
    $region12: #{tpu_custom_call.1} parent=1 // pred_region
      %s47 = ssub.s32 512, 512
      %48 = vsyncadd [#allocation6], %s47
      %s49 = sshll.u32 [#allocation7], 4
      %s50 = int_to_ptr.vmem [resolvable:$true] %s49
      %55 = dma.hbm_to_vmem [thread:$0]  %s2, 512, %s50, [#allocation6], 64, 64, 4
    $region13: #{tpu_custom_call.1} parent=1 // pred_fallthru
      _
    // Predicated region
    $region14: #{tpu_custom_call.1} parent=1 // pred_check
      _
    $region15: #{tpu_custom_call.1} parent=1 // pred_check_branch
      %57 = sbr.rel (0) target = $region17
    $region16: #{tpu_custom_call.1} parent=1 // pred_region
      %s59 = ssub.s32 512, 512
      %60 = vsyncadd [#allocation9], %s59
      %s61 = sshll.u32 [#allocation8], 4
      %s62 = int_to_ptr.vmem [resolvable:$true] %s61
      %67 = dma.hbm_to_vmem [thread:$0]  %s3, 512, %s62, [#allocation9], 64, 64, 4
    $region17: #{tpu_custom_call.1} parent=1 // pred_fallthru
      _
    // Predicated region
    $region18: #{tpu_custom_call.1} parent=1 // pred_check
      _
    $region19: #{tpu_custom_call.1} parent=1 // pred_check_branch
      %69 = sbr.rel (0) target = $region21
    $region20: #{tpu_custom_call.1} parent=1 // pred_region
      _
    $region21: #{tpu_custom_call.1} parent=1 // pred_fallthru
      _
    // Predicated region
    $region22: #{tpu_custom_call.1} parent=1 // pred_check
      _
    $region23: #{tpu_custom_call.1} parent=1 // pred_check_branch
      %71 = sbr.rel (0) target = $region25
    $region24: #{tpu_custom_call.1} parent=1 // pred_region
      _
    $region25: #{tpu_custom_call.1} parent=1 // pred_fallthru
      _
    // Predicated region
    $region26: #{tpu_custom_call.1} parent=1 // pred_check
      _
    $region27: #{tpu_custom_call.1} parent=1 // pred_check_branch
      %73 = sbr.rel (0) target = $region29
    $region28: #{tpu_custom_call.1} parent=1 // pred_region
      _
    $region29: #{tpu_custom_call.1} parent=1 // pred_fallthru
      _
    // Predicated region
    $region30: #{tpu_custom_call.1} parent=1 // pred_check
      _
    $region31: #{tpu_custom_call.1} parent=1 // pred_check_branch
      %75 = sbr.rel (0) target = $region33
    $region32: #{tpu_custom_call.1} parent=1 // pred_region
      %76 = dma.done [#allocation3], 512
    $region33: #{tpu_custom_call.1} parent=1 // pred_fallthru
      _
    // Predicated region
    $region34: #{tpu_custom_call.1} parent=1 // pred_check
      _
    $region35: #{tpu_custom_call.1} parent=1 // pred_check_branch
      %78 = sbr.rel (0) target = $region37
    $region36: #{tpu_custom_call.1} parent=1 // pred_region
      %79 = dma.done [#allocation6], 512
    $region37: #{tpu_custom_call.1} parent=1 // pred_fallthru
      _
    // Predicated region
    $region38: #{tpu_custom_call.1} parent=1 // pred_check
      _
    $region39: #{tpu_custom_call.1} parent=1 // pred_check_branch
      %81 = sbr.rel (0) target = $region41
    $region40: #{tpu_custom_call.1} parent=1 // pred_region
      %82 = dma.done [#allocation6], 512
    $region41: #{tpu_custom_call.1} parent=1 // pred_fallthru
      _
    // Predicated region
    $region42: #{tpu_custom_call.1} parent=1 // pred_check
      _
    $region43: #{tpu_custom_call.1} parent=1 // pred_check_branch
      %84 = sbr.rel (0) target = $region45
    $region44: #{tpu_custom_call.1} parent=1 // pred_region
      %85 = dma.done [#allocation9], 512
    $region45: #{tpu_custom_call.1} parent=1 // pred_fallthru
      _
    %v87 = vld [vmem:[#allocation2] sm:$0xf]
    %v88 = vld [vmem:[#allocation2 + $0x4] sm:$0xf]
    %v89 = vld [vmem:[#allocation2 + $0x8] sm:$0xf]
    %v90 = vld [vmem:[#allocation2 + $0xc] sm:$0xf]
    %v91 = vld [vmem:[#allocation2 + $0x10] sm:$0xf]
    %v92 = vld [vmem:[#allocation2 + $0x14] sm:$0xf]
    %v93 = vld [vmem:[#allocation2 + $0x18] sm:$0xf]
    %v94 = vld [vmem:[#allocation2 + $0x1c] sm:$0xf]
    %v95 = vld [vmem:[#allocation5] sm:$0xf]
    %v96 = vld [vmem:[#allocation5 + $0x4] sm:$0xf]
    %v97 = vld [vmem:[#allocation5 + $0x8] sm:$0xf]
    %v98 = vld [vmem:[#allocation5 + $0xc] sm:$0xf]
    %v99 = vld [vmem:[#allocation5 + $0x10] sm:$0xf]
    %v100 = vld [vmem:[#allocation5 + $0x14] sm:$0xf]
    %v101 = vld [vmem:[#allocation5 + $0x18] sm:$0xf]
    %v102 = vld [vmem:[#allocation5 + $0x1c] sm:$0xf]
    %v103 = vld [vmem:[%s4] sm:$0x1]
    %v105 = vlaneseq
    %v106 = vshrl.u32 %v105, 7
    %v107 = vsub.s32 0, %v106
    %v108 = vrot.slane %v103, %v107
    %v118 = vunpack.c.l.b16 %v87
    %v119 = vunpack.c.l.b16 %v88
    %v120 = vunpack.c.l.b16 %v89
    %v121 = vunpack.c.l.b16 %v90
    %v122 = vunpack.c.l.b16 %v91
    %v123 = vunpack.c.l.b16 %v92
    %v124 = vunpack.c.l.b16 %v93
    %v125 = vunpack.c.l.b16 %v94
    %v126 = vpack.c.b16 %v119, %v118
    %v127 = vpack.c.b16 %v121, %v120
    %v128 = vpack.c.b16 %v123, %v122
    %v129 = vpack.c.b16 %v125, %v124
    %v138 = vunpack.c.l.b16 %v95
    %v139 = vunpack.c.l.b16 %v96
    %v140 = vunpack.c.l.b16 %v97
    %v141 = vunpack.c.l.b16 %v98
    %v142 = vunpack.c.l.b16 %v99
    %v143 = vunpack.c.l.b16 %v100
    %v144 = vunpack.c.l.b16 %v101
    %v145 = vunpack.c.l.b16 %v102
    %v146 = vpack.c.b16 %v139, %v138
    %v147 = vpack.c.b16 %v141, %v140
    %v148 = vpack.c.b16 %v143, %v142
    %v149 = vpack.c.b16 %v145, %v144
    %vm154 = vcmask 523264
    %v156 = vsel %vm154, %v126, 0
    %v159 = vsel %vm154, %v127, 0
    %v162 = vsel %vm154, %v128, 0
    %v165 = vsel %vm154, %v129, 0
    %167 = vmatprep.subr.bf16.mxu0 0
    %168 = vmatpush1.bf16.msra.mxu0 %v146
    %169 = vmatprep.subr.bf16.mxu0 0
    %170 = vmatpush1.bf16.msra.mxu0 %v147
    %171 = vmatprep.subr.bf16.mxu0 0
    %172 = vmatpush1.bf16.msra.mxu0 %v148
    %173 = vmatprep.subr.bf16.mxu0 0
    %174 = vmatpush1.bf16.msra.mxu0 %v149
    %175 = vmatprep.subr.bf16.mxu0 0
    %176 = vmatpush1.bf16.msra.mxu0 0
    %177 = vmatprep.subr.bf16.mxu0 0
    %178 = vmatpush1.bf16.msra.mxu0 0
    %179 = vmatprep.subr.bf16.mxu0 0
    %180 = vmatpush1.bf16.msra.mxu0 0
    %181 = vmatprep.subr.bf16.mxu0 0
    %182 = vmatpush1.bf16.msra.mxu0 0
    %183 = vmatprep.subr.bf16.mxu0 0
    %184 = vmatpush1.bf16.msra.mxu0 0
    %185 = vmatprep.subr.bf16.mxu0 0
    %186 = vmatpush1.bf16.msra.mxu0 0
    %187 = vmatprep.subr.bf16.mxu0 0
    %188 = vmatpush1.bf16.msra.mxu0 0
    %189 = vmatprep.subr.bf16.mxu0 0
    %190 = vmatpush1.bf16.msra.mxu0 0
    %191 = vmatprep.subr.bf16.mxu0 0
    %192 = vmatpush1.bf16.msra.mxu0 0
    %193 = vmatprep.subr.bf16.mxu0 0
    %194 = vmatpush1.bf16.msra.mxu0 0
    %195 = vmatprep.subr.bf16.mxu0 0
    %196 = vmatpush1.bf16.msra.mxu0 0
    %197 = vmatprep.subr.bf16.mxu0 0
    %198 = vmatpush1.bf16.msra.mxu0 0
    %199 = vmatprep.mubr.bf16.mxu0 0
    %200 = vmatmul.mubr.bf16.gmra.mrb[0].mxu0 %v156
    %v201 = vpop.f32.mrb[0].mxu0
    %v202 = vadd.f32 %v108, %v201
    %v203 = vpop.f32.mrb[0].mxu0
    %v204 = vpop.f32.mrb[0].mxu0
    %v205 = vadd.f32 %v108, %v204
    %v206 = vpop.f32.mrb[0].mxu0
    %207 = vmatprep.mubr.bf16.mxu0 0
    %208 = vmatmul.mubr.bf16.gmra.mrb[0].mxu0 %v159
    %v209 = vpop.f32.mrb[0].mxu0
    %v210 = vadd.f32 %v108, %v209
    %v211 = vpop.f32.mrb[0].mxu0
    %v212 = vpop.f32.mrb[0].mxu0
    %v213 = vadd.f32 %v108, %v212
    %v214 = vpop.f32.mrb[0].mxu0
    %215 = vmatprep.mubr.bf16.mxu0 0
    %216 = vmatmul.mubr.bf16.gmra.mrb[0].mxu0 %v162
    %v217 = vpop.f32.mrb[0].mxu0
    %v218 = vadd.f32 %v108, %v217
    %v219 = vpop.f32.mrb[0].mxu0
    %v220 = vpop.f32.mrb[0].mxu0
    %v221 = vadd.f32 %v108, %v220
    %v222 = vpop.f32.mrb[0].mxu0
    %223 = vmatprep.mubr.bf16.mxu0 0
    %224 = vmatmul.mubr.bf16.gmra.mrb[0].mxu0 %v165
    %v225 = vpop.f32.mrb[0].mxu0
    %v226 = vadd.f32 %v108, %v225
    %v227 = vpop.f32.mrb[0].mxu0
    %v228 = vpop.f32.mrb[0].mxu0
    %v229 = vadd.f32 %v108, %v228
    %v230 = vpop.f32.mrb[0].mxu0
    %231 = vdwg.mxu0
    %v232 = vpack.c.bf16 %v205, %v202
    %v233 = vpack.c.bf16 %v213, %v210
    %v234 = vpack.c.bf16 %v221, %v218
    %v235 = vpack.c.bf16 %v229, %v226
    %v240 = vunpack.c.l.b16 %v232
    %v241 = vunpack.c.h.b16 %v232
    %v242 = vunpack.c.l.b16 %v233
    %v243 = vunpack.c.h.b16 %v233
    %v244 = vunpack.c.l.b16 %v234
    %v245 = vunpack.c.h.b16 %v234
    %v246 = vunpack.c.l.b16 %v235
    %v247 = vunpack.c.h.b16 %v235
    %v248 = vpack.c.b16 %v240, %v240
    %v249 = vpack.c.b16 %v241, %v241
    %v250 = vpack.c.b16 %v242, %v242
    %v251 = vpack.c.b16 %v243, %v243
    %v252 = vpack.c.b16 %v244, %v244
    %v253 = vpack.c.b16 %v245, %v245
    %v254 = vpack.c.b16 %v246, %v246
    %v255 = vpack.c.b16 %v247, %v247
    %vm264 = vcmask 519168
    %265 = vst.msk [vmem:[#allocation10] sm:$0xf] %vm264, %v248
    %266 = vst.msk [vmem:[#allocation10 + $0x4] sm:$0xf] %vm264, %v249
    %267 = vst.msk [vmem:[#allocation10 + $0x8] sm:$0xf] %vm264, %v250
    %268 = vst.msk [vmem:[#allocation10 + $0xc] sm:$0xf] %vm264, %v251
    %269 = vst.msk [vmem:[#allocation10 + $0x10] sm:$0xf] %vm264, %v252
    %270 = vst.msk [vmem:[#allocation10 + $0x14] sm:$0xf] %vm264, %v253
    %271 = vst.msk [vmem:[#allocation10 + $0x18] sm:$0xf] %vm264, %v254
    %272 = vst.msk [vmem:[#allocation10 + $0x1c] sm:$0xf] %vm264, %v255
    %v273 = vld [vmem:[#allocation7] sm:$0xf]
    %v274 = vld [vmem:[#allocation7 + $0x4] sm:$0xf]
    %v275 = vld [vmem:[#allocation7 + $0x8] sm:$0xf]
    %v276 = vld [vmem:[#allocation7 + $0xc] sm:$0xf]
    %v277 = vld [vmem:[#allocation7 + $0x10] sm:$0xf]
    %v278 = vld [vmem:[#allocation7 + $0x14] sm:$0xf]
    %v279 = vld [vmem:[#allocation7 + $0x18] sm:$0xf]
    %v280 = vld [vmem:[#allocation7 + $0x1c] sm:$0xf]
    %v281 = vld [vmem:[%s5] sm:$0x1]
    %v283 = vlaneseq
    %v284 = vshrl.u32 %v283, 7
    %v285 = vsub.s32 0, %v284
    %v286 = vrot.slane %v281, %v285
    %v296 = vunpack.c.l.b16 %v273
    %v297 = vunpack.c.l.b16 %v274
    %v298 = vunpack.c.l.b16 %v275
    %v299 = vunpack.c.l.b16 %v276
    %v300 = vunpack.c.l.b16 %v277
    %v301 = vunpack.c.l.b16 %v278
    %v302 = vunpack.c.l.b16 %v279
    %v303 = vunpack.c.l.b16 %v280
    %v304 = vpack.c.b16 %v297, %v296
    %v305 = vpack.c.b16 %v299, %v298
    %v306 = vpack.c.b16 %v301, %v300
    %v307 = vpack.c.b16 %v303, %v302
    %312 = vmatprep.subr.bf16.mxu0 0
    %313 = vmatpush1.bf16.msra.mxu0 %v304
    %314 = vmatprep.subr.bf16.mxu0 0
    %315 = vmatpush1.bf16.msra.mxu0 %v305
    %316 = vmatprep.subr.bf16.mxu0 0
    %317 = vmatpush1.bf16.msra.mxu0 %v306
    %318 = vmatprep.subr.bf16.mxu0 0
    %319 = vmatpush1.bf16.msra.mxu0 %v307
    %320 = vmatprep.subr.bf16.mxu0 0
    %321 = vmatpush1.bf16.msra.mxu0 0
    %322 = vmatprep.subr.bf16.mxu0 0
    %323 = vmatpush1.bf16.msra.mxu0 0
    %324 = vmatprep.subr.bf16.mxu0 0
    %325 = vmatpush1.bf16.msra.mxu0 0
    %326 = vmatprep.subr.bf16.mxu0 0
    %327 = vmatpush1.bf16.msra.mxu0 0
    %328 = vmatprep.subr.bf16.mxu0 0
    %329 = vmatpush1.bf16.msra.mxu0 0
    %330 = vmatprep.subr.bf16.mxu0 0
    %331 = vmatpush1.bf16.msra.mxu0 0
    %332 = vmatprep.subr.bf16.mxu0 0
    %333 = vmatpush1.bf16.msra.mxu0 0
    %334 = vmatprep.subr.bf16.mxu0 0
    %335 = vmatpush1.bf16.msra.mxu0 0
    %336 = vmatprep.subr.bf16.mxu0 0
    %337 = vmatpush1.bf16.msra.mxu0 0
    %338 = vmatprep.subr.bf16.mxu0 0
    %339 = vmatpush1.bf16.msra.mxu0 0
    %340 = vmatprep.subr.bf16.mxu0 0
    %341 = vmatpush1.bf16.msra.mxu0 0
    %342 = vmatprep.subr.bf16.mxu0 0
    %343 = vmatpush1.bf16.msra.mxu0 0
    %344 = vmatprep.mubr.bf16.mxu0 0
    %345 = vmatmul.mubr.bf16.gmra.mrb[0].mxu0 %v156
    %v346 = vpop.f32.mrb[0].mxu0
    %v347 = vadd.f32 %v286, %v346
    %v348 = vpop.f32.mrb[0].mxu0
    %v349 = vpop.f32.mrb[0].mxu0
    %v350 = vadd.f32 %v286, %v349
    %v351 = vpop.f32.mrb[0].mxu0
    %352 = vmatprep.mubr.bf16.mxu0 0
    %353 = vmatmul.mubr.bf16.gmra.mrb[0].mxu0 %v159
    %v354 = vpop.f32.mrb[0].mxu0
    %v355 = vadd.f32 %v286, %v354
    %v356 = vpop.f32.mrb[0].mxu0
    %v357 = vpop.f32.mrb[0].mxu0
    %v358 = vadd.f32 %v286, %v357
    %v359 = vpop.f32.mrb[0].mxu0
    %360 = vmatprep.mubr.bf16.mxu0 0
    %361 = vmatmul.mubr.bf16.gmra.mrb[0].mxu0 %v162
    %v362 = vpop.f32.mrb[0].mxu0
    %v363 = vadd.f32 %v286, %v362
    %v364 = vpop.f32.mrb[0].mxu0
    %v365 = vpop.f32.mrb[0].mxu0
    %v366 = vadd.f32 %v286, %v365
    %v367 = vpop.f32.mrb[0].mxu0
    %368 = vmatprep.mubr.bf16.mxu0 0
    %369 = vmatmul.mubr.bf16.gmra.mrb[0].mxu0 %v165
    %v370 = vpop.f32.mrb[0].mxu0
    %v371 = vadd.f32 %v286, %v370
    %v372 = vpop.f32.mrb[0].mxu0
    %v373 = vpop.f32.mrb[0].mxu0
    %v374 = vadd.f32 %v286, %v373
    %v375 = vpop.f32.mrb[0].mxu0
    %376 = vdwg.mxu0
    %v377 = vpack.c.bf16 %v350, %v347
    %v378 = vpack.c.bf16 %v358, %v355
    %v379 = vpack.c.bf16 %v366, %v363
    %v380 = vpack.c.bf16 %v374, %v371
    %v385 = vunpack.c.l.b16 %v377
    %v386 = vunpack.c.h.b16 %v377
    %v387 = vunpack.c.l.b16 %v378
    %v388 = vunpack.c.h.b16 %v378
    %v389 = vunpack.c.l.b16 %v379
    %v390 = vunpack.c.h.b16 %v379
    %v391 = vunpack.c.l.b16 %v380
    %v392 = vunpack.c.h.b16 %v380
    %v393 = vpack.c.b16 %v385, %v385
    %v394 = vpack.c.b16 %v386, %v386
    %v395 = vpack.c.b16 %v387, %v387
    %v396 = vpack.c.b16 %v388, %v388
    %v397 = vpack.c.b16 %v389, %v389
    %v398 = vpack.c.b16 %v390, %v390
    %v399 = vpack.c.b16 %v391, %v391
    %v400 = vpack.c.b16 %v392, %v392
    %409 = vst.msk [vmem:[#allocation11] sm:$0xf] %vm264, %v393
    %410 = vst.msk [vmem:[#allocation11 + $0x4] sm:$0xf] %vm264, %v394
    %411 = vst.msk [vmem:[#allocation11 + $0x8] sm:$0xf] %vm264, %v395
    %412 = vst.msk [vmem:[#allocation11 + $0xc] sm:$0xf] %vm264, %v396
    %413 = vst.msk [vmem:[#allocation11 + $0x10] sm:$0xf] %vm264, %v397
    %414 = vst.msk [vmem:[#allocation11 + $0x14] sm:$0xf] %vm264, %v398
    %415 = vst.msk [vmem:[#allocation11 + $0x18] sm:$0xf] %vm264, %v399
    %416 = vst.msk [vmem:[#allocation11 + $0x1c] sm:$0xf] %vm264, %v400
    %v417 = vld [vmem:[#allocation8] sm:$0xf]
    %v418 = vld [vmem:[#allocation8 + $0x4] sm:$0xf]
    %v419 = vld [vmem:[#allocation8 + $0x8] sm:$0xf]
    %v420 = vld [vmem:[#allocation8 + $0xc] sm:$0xf]
    %v421 = vld [vmem:[#allocation8 + $0x10] sm:$0xf]
    %v422 = vld [vmem:[#allocation8 + $0x14] sm:$0xf]
    %v423 = vld [vmem:[#allocation8 + $0x18] sm:$0xf]
    %v424 = vld [vmem:[#allocation8 + $0x1c] sm:$0xf]
    %v425 = vld [vmem:[%s6] sm:$0x1]
    %v427 = vlaneseq
    %v428 = vshrl.u32 %v427, 7
    %v429 = vsub.s32 0, %v428
    %v430 = vrot.slane %v425, %v429
    %v440 = vunpack.c.l.b16 %v417
    %v441 = vunpack.c.l.b16 %v418
    %v442 = vunpack.c.l.b16 %v419
    %v443 = vunpack.c.l.b16 %v420
    %v444 = vunpack.c.l.b16 %v421
    %v445 = vunpack.c.l.b16 %v422
    %v446 = vunpack.c.l.b16 %v423
    %v447 = vunpack.c.l.b16 %v424
    %v448 = vpack.c.b16 %v441, %v440
    %v449 = vpack.c.b16 %v443, %v442
    %v450 = vpack.c.b16 %v445, %v444
    %v451 = vpack.c.b16 %v447, %v446
    %456 = vmatprep.subr.bf16.mxu0 0
    %457 = vmatpush1.bf16.msra.mxu0 %v448
    %458 = vmatprep.subr.bf16.mxu0 0
    %459 = vmatpush1.bf16.msra.mxu0 %v449
    %460 = vmatprep.subr.bf16.mxu0 0
    %461 = vmatpush1.bf16.msra.mxu0 %v450
    %462 = vmatprep.subr.bf16.mxu0 0
    %463 = vmatpush1.bf16.msra.mxu0 %v451
    %464 = vmatprep.subr.bf16.mxu0 0
    %465 = vmatpush1.bf16.msra.mxu0 0
    %466 = vmatprep.subr.bf16.mxu0 0
    %467 = vmatpush1.bf16.msra.mxu0 0
    %468 = vmatprep.subr.bf16.mxu0 0
    %469 = vmatpush1.bf16.msra.mxu0 0
    %470 = vmatprep.subr.bf16.mxu0 0
    %471 = vmatpush1.bf16.msra.mxu0 0
    %472 = vmatprep.subr.bf16.mxu0 0
    %473 = vmatpush1.bf16.msra.mxu0 0
    %474 = vmatprep.subr.bf16.mxu0 0
    %475 = vmatpush1.bf16.msra.mxu0 0
    %476 = vmatprep.subr.bf16.mxu0 0
    %477 = vmatpush1.bf16.msra.mxu0 0
    %478 = vmatprep.subr.bf16.mxu0 0
    %479 = vmatpush1.bf16.msra.mxu0 0
    %480 = vmatprep.subr.bf16.mxu0 0
    %481 = vmatpush1.bf16.msra.mxu0 0
    %482 = vmatprep.subr.bf16.mxu0 0
    %483 = vmatpush1.bf16.msra.mxu0 0
    %484 = vmatprep.subr.bf16.mxu0 0
    %485 = vmatpush1.bf16.msra.mxu0 0
    %486 = vmatprep.subr.bf16.mxu0 0
    %487 = vmatpush1.bf16.msra.mxu0 0
    %488 = vmatprep.mubr.bf16.mxu0 0
    %489 = vmatmul.mubr.bf16.gmra.mrb[0].mxu0 %v156
    %v490 = vpop.f32.mrb[0].mxu0
    %v491 = vadd.f32 %v430, %v490
    %v492 = vpop.f32.mrb[0].mxu0
    %v493 = vpop.f32.mrb[0].mxu0
    %v494 = vadd.f32 %v430, %v493
    %v495 = vpop.f32.mrb[0].mxu0
    %496 = vmatprep.mubr.bf16.mxu0 0
    %497 = vmatmul.mubr.bf16.gmra.mrb[0].mxu0 %v159
    %v498 = vpop.f32.mrb[0].mxu0
    %v499 = vadd.f32 %v430, %v498
    %v500 = vpop.f32.mrb[0].mxu0
    %v501 = vpop.f32.mrb[0].mxu0
    %v502 = vadd.f32 %v430, %v501
    %v503 = vpop.f32.mrb[0].mxu0
    %504 = vmatprep.mubr.bf16.mxu0 0
    %505 = vmatmul.mubr.bf16.gmra.mrb[0].mxu0 %v162
    %v506 = vpop.f32.mrb[0].mxu0
    %v507 = vadd.f32 %v430, %v506
    %v508 = vpop.f32.mrb[0].mxu0
    %v509 = vpop.f32.mrb[0].mxu0
    %v510 = vadd.f32 %v430, %v509
    %v511 = vpop.f32.mrb[0].mxu0
    %512 = vmatprep.mubr.bf16.mxu0 0
    %513 = vmatmul.mubr.bf16.gmra.mrb[0].mxu0 %v165
    %v514 = vpop.f32.mrb[0].mxu0
    %v515 = vadd.f32 %v430, %v514
    %v516 = vpop.f32.mrb[0].mxu0
    %v517 = vpop.f32.mrb[0].mxu0
    %v518 = vadd.f32 %v430, %v517
    %v519 = vpop.f32.mrb[0].mxu0
    %520 = vdwg.mxu0
    %v521 = vpack.c.bf16 %v494, %v491
    %v522 = vpack.c.bf16 %v502, %v499
    %v523 = vpack.c.bf16 %v510, %v507
    %v524 = vpack.c.bf16 %v518, %v515
    %v529 = vunpack.c.l.b16 %v521
    %v530 = vunpack.c.h.b16 %v521
    %v531 = vunpack.c.l.b16 %v522
    %v532 = vunpack.c.h.b16 %v522
    %v533 = vunpack.c.l.b16 %v523
    %v534 = vunpack.c.h.b16 %v523
    %v535 = vunpack.c.l.b16 %v524
    %v536 = vunpack.c.h.b16 %v524
    %v537 = vpack.c.b16 %v529, %v529
    %v538 = vpack.c.b16 %v530, %v530
    %v539 = vpack.c.b16 %v531, %v531
    %v540 = vpack.c.b16 %v532, %v532
    %v541 = vpack.c.b16 %v533, %v533
    %v542 = vpack.c.b16 %v534, %v534
    %v543 = vpack.c.b16 %v535, %v535
    %v544 = vpack.c.b16 %v536, %v536
    %553 = vst.msk [vmem:[#allocation13] sm:$0xf] %vm264, %v537
    %554 = vst.msk [vmem:[#allocation13 + $0x4] sm:$0xf] %vm264, %v538
    %555 = vst.msk [vmem:[#allocation13 + $0x8] sm:$0xf] %vm264, %v539
    %556 = vst.msk [vmem:[#allocation13 + $0xc] sm:$0xf] %vm264, %v540
    %557 = vst.msk [vmem:[#allocation13 + $0x10] sm:$0xf] %vm264, %v541
    %558 = vst.msk [vmem:[#allocation13 + $0x14] sm:$0xf] %vm264, %v542
    %559 = vst.msk [vmem:[#allocation13 + $0x18] sm:$0xf] %vm264, %v543
    %560 = vst.msk [vmem:[#allocation13 + $0x1c] sm:$0xf] %vm264, %v544
    // Predicated region
    $region46: #{tpu_custom_call.1} parent=1 // pred_check
      _
    $region47: #{tpu_custom_call.1} parent=1 // pred_check_branch
      %562 = sbr.rel (0) target = $region49
    $region48: #{tpu_custom_call.1} parent=1 // pred_region
      %s564 = ssub.s32 512, 512
      %565 = vsyncadd [#allocation4], %s564
      %s566 = sshll.u32 [#allocation10], 4
      %s567 = int_to_ptr.vmem [resolvable:$true] %s566
      %572 = dma.vmem_to_hbm [thread:$0]  %s567, 512, %s7, [#allocation4], 64, 64, 4
    $region49: #{tpu_custom_call.1} parent=1 // pred_fallthru
      _
    // Predicated region
    $region50: #{tpu_custom_call.1} parent=1 // pred_check
      _
    $region51: #{tpu_custom_call.1} parent=1 // pred_check_branch
      %574 = sbr.rel (0) target = $region53
    $region52: #{tpu_custom_call.1} parent=1 // pred_region
      %s576 = ssub.s32 512, 512
      %577 = vsyncadd [#allocation12], %s576
      %s578 = sshll.u32 [#allocation11], 4
      %s579 = int_to_ptr.vmem [resolvable:$true] %s578
      %584 = dma.vmem_to_hbm [thread:$0]  %s579, 512, %s8, [#allocation12], 64, 64, 4
    $region53: #{tpu_custom_call.1} parent=1 // pred_fallthru
      _
    // Predicated region
    $region54: #{tpu_custom_call.1} parent=1 // pred_check
      _
    $region55: #{tpu_custom_call.1} parent=1 // pred_check_branch
      %586 = sbr.rel (0) target = $region57
    $region56: #{tpu_custom_call.1} parent=1 // pred_region
      %s588 = ssub.s32 512, 512
      %589 = vsyncadd [#allocation12], %s588
      %s590 = sshll.u32 [#allocation13], 4
      %s591 = int_to_ptr.vmem [resolvable:$true] %s590
      %596 = dma.vmem_to_hbm [thread:$0]  %s591, 512, %s9, [#allocation12], 64, 64, 4
    $region57: #{tpu_custom_call.1} parent=1 // pred_fallthru
      _
    // Predicated region
    $region58: #{tpu_custom_call.1} parent=1 // pred_check
      _
    $region59: #{tpu_custom_call.1} parent=1 // pred_check_branch
      %598 = sbr.rel (0) target = $region61
    $region60: #{tpu_custom_call.1} parent=1 // pred_region
      %599 = dma.done [#allocation4], 512
    $region61: #{tpu_custom_call.1} parent=1 // pred_fallthru
      _
    // Predicated region
    $region62: #{tpu_custom_call.1} parent=1 // pred_check
      _
    $region63: #{tpu_custom_call.1} parent=1 // pred_check_branch
      %601 = sbr.rel (0) target = $region65
    $region64: #{tpu_custom_call.1} parent=1 // pred_region
      %602 = dma.done [#allocation12], 512
    $region65: #{tpu_custom_call.1} parent=1 // pred_fallthru
      _
    // Predicated region
    $region66: #{tpu_custom_call.1} parent=1 // pred_check
      _
    $region67: #{tpu_custom_call.1} parent=1 // pred_check_branch
      %604 = sbr.rel (0) target = $region69
    $region68: #{tpu_custom_call.1} parent=1 // pred_region
      %605 = dma.done [#allocation12], 512
    $region69: #{tpu_custom_call.1} parent=1 // pred_fallthru
      _
    %606 = vsyncpa [#allocation3], 1
    %607 = vsyncpa [#allocation6], 1
    %608 = vsyncpa [#allocation9], 1
    %609 = vsyncpa [#allocation4], 1
    %610 = vsyncpa [#allocation12], 1

</llo_original>
